<compile_context>
chip_gen: v7x
topology: tpu7x:2x2x1
jax: 0.10.0
libtpu: 0.0.40
codegen_flags: <defaults>
</compile_context>

<pallas_src>
import functools

import jax
import jax.numpy as jnp
from jax.experimental import pallas as pl
from jax.experimental.pallas import tpu as pltpu


LANE = 128  # TPU lane width; pad all feature dims to a multiple of this.


def _round_up(x: int, m: int) -> int:
    return (x + m - 1) // m * m


# ---------------------------------------------------------------------------
# Fused MLP kernel: chain of (matmul + bias + activation) on one batch tile.
# ---------------------------------------------------------------------------
def _mlp_kernel(*refs, n_layers: int, activation: str):
    # refs = (x_ref, w0_ref, b0_ref, w1_ref, b1_ref, ..., o_ref)
    # x_ref : (block_b, d0_p)       VMEM
    # wl_ref: (dl_p, d{l+1}_p)      VMEM (whole padded weight, resident)
    # bl_ref: (1, d{l+1}_p)         VMEM
    # o_ref : (block_b, dL_p)       VMEM
    x_ref = refs[0]
    o_ref = refs[-1]
    wb = refs[1:-1]

    h = x_ref[...]  # compute dtype (f32 or bf16)
    for l in range(n_layers):
        w = wb[2 * l][...]
        b = wb[2 * l + 1][...]
        # MXU matmul with f32 accumulation regardless of input dtype.
        y = jnp.dot(h.astype(w.dtype), w, preferred_element_type=jnp.float32)
        y = y + b.astype(jnp.float32)  # broadcast (1, dout) over rows
        if l < n_layers - 1:  # hidden-layer activation only (final layer is bare Linear)
            if activation == "relu":
                y = jnp.maximum(y, 0.0)          # VPU
            elif activation == "tanh":
                y = jnp.tanh(y)                  # EUP, co-issues with MXU
            # "identity": no-op (nn.Identity default of the module)
        h = y  # stays f32 between layers; cast down per-dot if bf16 compute
    o_ref[...] = h.astype(o_ref.dtype)


# ---------------------------------------------------------------------------
# Parameters (deterministic init mimicking torch.nn.Linear: U(+-1/sqrt(fan_in)))
# ---------------------------------------------------------------------------
def init_encoder_params(key, obs_dim, encoded_dim, hidden_layer_sizes):
    sizes = [obs_dim] + list(hidden_layer_sizes or []) + [encoded_dim]
    params = []
    for fan_in, fan_out in zip(sizes[:-1], sizes[1:]):
        key, wk, bk = jax.random.split(key, 3)
        bound = 1.0 / jnp.sqrt(jnp.float32(fan_in))
        w = jax.random.uniform(wk, (fan_in, fan_out), jnp.float32, -bound, bound)
        b = jax.random.uniform(bk, (1, fan_out), jnp.float32, -bound, bound)
        params.append((w, b))
    return params


# ---------------------------------------------------------------------------
# Forward pass: one fused pallas_call over the whole MLP, grid over batch.
# ---------------------------------------------------------------------------
def encoder_forward(params, obs, *, hidden_activation: str = "identity",
                    block_b: int = 128, compute_dtype=jnp.float32):
    """forward(obs) -> encoded_obs, matching AbstractEnvironmentEncoder."""
    B, obs_dim = obs.shape
    n_layers = len(params)

    # Real and lane-padded feature dims per stage.
    dims = [obs_dim] + [w.shape[1] for (w, _) in params]
    pdims = [_round_up(d, LANE) for d in dims]
    encoded_dim = dims[-1]

    # Zero-pad params to lane-dense shapes; cast weights to the compute dtype.
    flat_wb = []
    for l, (w, b) in enumerate(params):
        w_p = jnp.zeros((pdims[l], pdims[l + 1]), compute_dtype)
        w_p = w_p.at[: w.shape[0], : w.shape[1]].set(w.astype(compute_dtype))
        b_p = jnp.zeros((1, pdims[l + 1]), jnp.float32)
        b_p = b_p.at[:, : b.shape[1]].set(b.astype(jnp.float32))
        flat_wb += [w_p, b_p]

    # Batch tiling: big MXU-friendly tile, shrunk (to a multiple of 8) only
    # when the batch itself is smaller; pad batch so ragged sizes keep it.
    if B < block_b:
        block_b = max(8, _round_up(B, 8))
    Bp = _round_up(B, block_b)
    x = jnp.zeros((Bp, pdims[0]), compute_dtype)
    x = x.at[:B, :obs_dim].set(obs.astype(compute_dtype))

    kernel = functools.partial(
        _mlp_kernel, n_layers=n_layers, activation=hidden_activation)

    in_specs = [pl.BlockSpec((block_b, pdims[0]), lambda i: (i, 0))]
    for w_p, b_p in zip(flat_wb[0::2], flat_wb[1::2]):
        in_specs.append(pl.BlockSpec(w_p.shape, lambda i: (0, 0)))  # resident weight
        in_specs.append(pl.BlockSpec(b_p.shape, lambda i: (0, 0)))  # resident bias

    out_padded = pl.pallas_call(
        kernel,
        out_shape=jax.ShapeDtypeStruct((Bp, pdims[-1]), obs.dtype),
        grid=(Bp // block_b,),
        in_specs=in_specs,
        out_specs=pl.BlockSpec((block_b, pdims[-1]), lambda i: (i, 0)),
        compiler_params=pltpu.CompilerParams(
            dimension_semantics=("parallel",),  # batch axis shards across TCs (v7x)
        ),
    )(x, *flat_wb)

    # Slice the batch / lane padding back off.
    return out_padded[:B, :encoded_dim]


# ---------------------------------------------------------------------------
# Pure-JAX reference for correctness checking.
# ---------------------------------------------------------------------------
def encoder_forward_ref(params, obs, *, hidden_activation: str = "identity"):
    h = obs
    n = len(params)
    for idx, (w, b) in enumerate(params):
        h = h @ w + b
        if idx < n - 1:
            if hidden_activation == "relu":
                h = jnp.maximum(h, 0.0)
            elif hidden_activation == "tanh":
                h = jnp.tanh(h)
    return h


if __name__ == "__main__":
    # Small shapes consistent with the module's forward (obs: (batch, obs_dim)).
    batch, obs_dim, encoded_dim = 16, 16, 8
    hidden_layer_sizes = [32]
    hidden_activation = "identity"  # module default: nn.Identity

    key = jax.random.PRNGKey(0)
    key, obs_key = jax.random.split(key)
    obs = jax.random.normal(obs_key, (batch, obs_dim), jnp.float32)

    params = init_encoder_params(key, obs_dim, encoded_dim, hidden_layer_sizes)
    ref = encoder_forward_ref(params, obs, hidden_activation=hidden_activation)

    # f32 compute path (default).
    out = encoder_forward(params, obs, hidden_activation=hidden_activation)
    out = jax.block_until_ready(out)
    assert out.shape == (batch, encoded_dim)
    assert jnp.allclose(out, ref, atol=1e-4, rtol=1e-4), "f32 mismatch vs reference"

    # bf16 compute path (v6e/v7x-friendly): bf16 weights/activations, f32 accumulation.
    out_bf16 = encoder_forward(params, obs, hidden_activation=hidden_activation,
                               compute_dtype=jnp.bfloat16)
    out_bf16 = jax.block_until_ready(out_bf16)
    assert out_bf16.shape == (batch, encoded_dim)
    assert jnp.allclose(out_bf16, ref, atol=5e-2, rtol=5e-2), "bf16 mismatch vs reference"

    print("KERNEL_OK")
</pallas_src>

<mosaic_0001>
module attributes {stable_mosaic.version = 11 : i64} {
  func.func @_mlp_kernel(%arg0: i32, %arg1: memref<16x128xf32, #tpu.memory_space<vmem>>, %arg2: memref<128x128xf32, #tpu.memory_space<vmem>>, %arg3: memref<1x128xf32, #tpu.memory_space<vmem>>, %arg4: memref<128x128xf32, #tpu.memory_space<vmem>>, %arg5: memref<1x128xf32, #tpu.memory_space<vmem>>, %arg6: memref<16x128xf32, #tpu.memory_space<vmem>>) attributes {dimension_semantics = [#tpu.dimension_semantics<parallel>], iteration_bounds = array<i64: 1>, scalar_prefetch = 0 : i64, scratch_operands = 0 : i64, tpu.core_type = #tpu.core_type<tc>, window_params = [{transform_indices = @transform_0, window_bounds = array<i64: 16, 128>}, {pipeline_mode = #tpu.pipeline_mode<synchronous>, transform_indices = @transform_1, window_bounds = array<i64: 128, 128>}, {pipeline_mode = #tpu.pipeline_mode<synchronous>, transform_indices = @transform_2, window_bounds = array<i64: 1, 128>}, {pipeline_mode = #tpu.pipeline_mode<synchronous>, transform_indices = @transform_3, window_bounds = array<i64: 128, 128>}, {pipeline_mode = #tpu.pipeline_mode<synchronous>, transform_indices = @transform_4, window_bounds = array<i64: 1, 128>}, {transform_indices = @transform_5, window_bounds = array<i64: 16, 128>}]} {
    %c0 = arith.constant 0 : index
    %c0_0 = arith.constant 0 : index
    %0 = vector.load %arg1[%c0, %c0_0] : memref<16x128xf32, #tpu.memory_space<vmem>>, vector<16x128xf32>
    %c0_1 = arith.constant 0 : index
    %c0_2 = arith.constant 0 : index
    %1 = vector.load %arg2[%c0_1, %c0_2] : memref<128x128xf32, #tpu.memory_space<vmem>>, vector<128x128xf32>
    %c0_3 = arith.constant 0 : index
    %c0_4 = arith.constant 0 : index
    %2 = vector.load %arg3[%c0_3, %c0_4] : memref<1x128xf32, #tpu.memory_space<vmem>>, vector<1x128xf32>
    %cst = arith.constant dense<0.000000e+00> : vector<16x128xf32>
    %3 = tpu.matmul %0, %1, %cst {dimension_numbers = #tpu.dot_dimension_numbers<[1], [0], [0], [1], [0, 0, 1, 1], [], []>} : vector<16x128xf32>, vector<128x128xf32>, vector<16x128xf32> -> vector<16x128xf32>
    %4 = vector.broadcast %2 : vector<1x128xf32> to vector<16x128xf32>
    %5 = arith.addf %3, %4 : vector<16x128xf32>
    %c0_5 = arith.constant 0 : index
    %c0_6 = arith.constant 0 : index
    %6 = vector.load %arg4[%c0_5, %c0_6] : memref<128x128xf32, #tpu.memory_space<vmem>>, vector<128x128xf32>
    %c0_7 = arith.constant 0 : index
    %c0_8 = arith.constant 0 : index
    %7 = vector.load %arg5[%c0_7, %c0_8] : memref<1x128xf32, #tpu.memory_space<vmem>>, vector<1x128xf32>
    %cst_9 = arith.constant dense<0.000000e+00> : vector<16x128xf32>
    %8 = tpu.matmul %5, %6, %cst_9 {dimension_numbers = #tpu.dot_dimension_numbers<[1], [0], [0], [1], [0, 0, 1, 1], [], []>} : vector<16x128xf32>, vector<128x128xf32>, vector<16x128xf32> -> vector<16x128xf32>
    %9 = vector.broadcast %7 : vector<1x128xf32> to vector<16x128xf32>
    %10 = arith.addf %8, %9 : vector<16x128xf32>
    %c0_10 = arith.constant 0 : index
    %c0_11 = arith.constant 0 : index
    %11 = vector.load %arg6[%c0_10, %c0_11] : memref<16x128xf32, #tpu.memory_space<vmem>>, vector<16x128xf32>
    tpu.vector_store %arg6[%c0_10, %c0_11], %10 {strides = array<i32>} : memref<16x128xf32, #tpu.memory_space<vmem>>, vector<16x128xf32>,
    return
  }
  func.func @transform_0(%arg0: i32) -> (i32, i32) {
    %c0_i32 = arith.constant 0 : i32
    %c0_i32_0 = arith.constant 0 : i32
    return %arg0, %c0_i32 : i32, i32
  }
  func.func @transform_1(%arg0: i32) -> (i32, i32) {
    %c0_i32 = arith.constant 0 : i32
    %c0_i32_0 = arith.constant 0 : i32
    %c0_i32_1 = arith.constant 0 : i32
    return %c0_i32, %c0_i32_0 : i32, i32
  }
  func.func @transform_2(%arg0: i32) -> (i32, i32) {
    %c0_i32 = arith.constant 0 : i32
    %c0_i32_0 = arith.constant 0 : i32
    %c0_i32_1 = arith.constant 0 : i32
    return %c0_i32, %c0_i32_0 : i32, i32
  }
  func.func @transform_3(%arg0: i32) -> (i32, i32) {
    %c0_i32 = arith.constant 0 : i32
    %c0_i32_0 = arith.constant 0 : i32
    %c0_i32_1 = arith.constant 0 : i32
    return %c0_i32, %c0_i32_0 : i32, i32
  }
  func.func @transform_4(%arg0: i32) -> (i32, i32) {
    %c0_i32 = arith.constant 0 : i32
    %c0_i32_0 = arith.constant 0 : i32
    %c0_i32_1 = arith.constant 0 : i32
    return %c0_i32, %c0_i32_0 : i32, i32
  }
  func.func @transform_5(%arg0: i32) -> (i32, i32) {
    %c0_i32 = arith.constant 0 : i32
    %c0_i32_0 = arith.constant 0 : i32
    return %arg0, %c0_i32 : i32, i32
  }
}

</mosaic_0001>

<llo_original>
// kernel: tpu_custom_call.1
$region0: #{tpu_custom_call.1}
  #allocation0 [shape = 'u32[]', space=smem, size = 0x4, offset = 0x4, fixed_abs, tag = 'smem constant byte address 0x4 - core index']
  #allocation1 [shape = 'u32[144,128]{1,0:T(1,128)}', space=vmem, size = 0x12000, scoped, tag = 'internal scratch']
  %s0 = inlined_call_operand.hbm [shape: f32[16,128], index: 0, kind: input, shape index: {}]
  %s1 = inlined_call_operand.hbm [shape: f32[128,128], index: 1, kind: input, shape index: {}]
  %s2 = inlined_call_operand.vmem [shape: f32[1,128], index: 2, kind: input, shape index: {}]
  %s3 = inlined_call_operand.hbm [shape: f32[128,128], index: 3, kind: input, shape index: {}]
  %s4 = inlined_call_operand.vmem [shape: f32[1,128], index: 4, kind: input, shape index: {}]
  %s5 = inlined_call_operand.hbm [shape: f32[16,128], index: 5, kind: output, shape index: {}]
  %s6 = sld [smem:[#allocation0]]
  $region42: #{tpu_custom_call.1} parent=0
    _
  %s8 = ssub.s32 1, %s6
  %s9 = scalar_select 0, %s8, %s6
  $region1: #{tpu_custom_call.1} parent=0
    #allocation2 [shape = 'u8[8192]{0}', space=vmem, size = 0x2000, scoped, tag = 'input window, operand 0, single buffered']
    #allocation3 [shape = 's32[1]{0}', space=sflag, size = 0x4, scoped, tag = 'scoped memory for tpu_custom_call.1']
    #allocation4 [shape = 's32[1]{0}', space=sflag, size = 0x4, scoped, tag = 'scoped memory for tpu_custom_call.1']
    #allocation5 [shape = 'u8[65536]{0}', space=vmem, size = 0x10000, scoped, tag = 'input window, operand 1, single buffered']
    #allocation6 [shape = 's32[1]{0}', space=sflag, size = 0x4, scoped, tag = 'scoped memory for tpu_custom_call.1']
    #allocation7 [shape = 'u8[65536]{0}', space=vmem, size = 0x10000, scoped, tag = 'input window, operand 3, single buffered']
    #allocation8 [shape = 'u8[8192]{0}', space=vmem, size = 0x2000, scoped, tag = 'output window, operand 0, single buffered']
    %10 = vsyncpa [#allocation3], 0
    %11 = vsyncpa [#allocation6], 0
    %12 = vsyncpa [#allocation4], 0
    // Predicated region
    $region2: #{tpu_custom_call.1} parent=1 // pred_check
      _
    $region3: #{tpu_custom_call.1} parent=1 // pred_check_branch
      %14 = sbr.rel (0) target = $region5
    $region4: #{tpu_custom_call.1} parent=1 // pred_region
      %s16 = ssub.s32 256, 256
      %17 = vsyncadd [#allocation3], %s16
      %s18 = sshll.u32 [#allocation2], 4
      %s19 = int_to_ptr.vmem [resolvable:$true] %s18
      %24 = dma.hbm_to_vmem [thread:$0]  %s0, 256, %s19, [#allocation3], 128, 128, 8
    $region5: #{tpu_custom_call.1} parent=1 // pred_fallthru
      _
    // Predicated region
    $region6: #{tpu_custom_call.1} parent=1 // pred_check
      _
    $region7: #{tpu_custom_call.1} parent=1 // pred_check_branch
      %26 = sbr.rel (0) target = $region9
    $region8: #{tpu_custom_call.1} parent=1 // pred_region
      %s28 = ssub.s32 2048, 2048
      %29 = vsyncadd [#allocation6], %s28
      %s30 = sshll.u32 [#allocation5], 4
      %s31 = int_to_ptr.vmem [resolvable:$true] %s30
      %36 = dma.hbm_to_vmem [thread:$0]  %s1, 2048, %s31, [#allocation6], 128, 128, 8
    $region9: #{tpu_custom_call.1} parent=1 // pred_fallthru
      _
    // Predicated region
    $region10: #{tpu_custom_call.1} parent=1 // pred_check
      _
    $region11: #{tpu_custom_call.1} parent=1 // pred_check_branch
      %38 = sbr.rel (0) target = $region13
    $region12: #{tpu_custom_call.1} parent=1 // pred_region
      _
    $region13: #{tpu_custom_call.1} parent=1 // pred_fallthru
      _
    // Predicated region
    $region14: #{tpu_custom_call.1} parent=1 // pred_check
      _
    $region15: #{tpu_custom_call.1} parent=1 // pred_check_branch
      %40 = sbr.rel (0) target = $region17
    $region16: #{tpu_custom_call.1} parent=1 // pred_region
      %s42 = ssub.s32 2048, 2048
      %43 = vsyncadd [#allocation6], %s42
      %s44 = sshll.u32 [#allocation7], 4
      %s45 = int_to_ptr.vmem [resolvable:$true] %s44
      %50 = dma.hbm_to_vmem [thread:$0]  %s3, 2048, %s45, [#allocation6], 128, 128, 8
    $region17: #{tpu_custom_call.1} parent=1 // pred_fallthru
      _
    // Predicated region
    $region18: #{tpu_custom_call.1} parent=1 // pred_check
      _
    $region19: #{tpu_custom_call.1} parent=1 // pred_check_branch
      %52 = sbr.rel (0) target = $region21
    $region20: #{tpu_custom_call.1} parent=1 // pred_region
      _
    $region21: #{tpu_custom_call.1} parent=1 // pred_fallthru
      _
    // Predicated region
    $region22: #{tpu_custom_call.1} parent=1 // pred_check
      _
    $region23: #{tpu_custom_call.1} parent=1 // pred_check_branch
      %54 = sbr.rel (0) target = $region25
    $region24: #{tpu_custom_call.1} parent=1 // pred_region
      %55 = dma.done [#allocation3], 256
    $region25: #{tpu_custom_call.1} parent=1 // pred_fallthru
      _
    // Predicated region
    $region26: #{tpu_custom_call.1} parent=1 // pred_check
      _
    $region27: #{tpu_custom_call.1} parent=1 // pred_check_branch
      %57 = sbr.rel (0) target = $region29
    $region28: #{tpu_custom_call.1} parent=1 // pred_region
      %58 = dma.done [#allocation6], 2048
    $region29: #{tpu_custom_call.1} parent=1 // pred_fallthru
      _
    // Predicated region
    $region30: #{tpu_custom_call.1} parent=1 // pred_check
      _
    $region31: #{tpu_custom_call.1} parent=1 // pred_check_branch
      %60 = sbr.rel (0) target = $region33
    $region32: #{tpu_custom_call.1} parent=1 // pred_region
      %61 = dma.done [#allocation6], 2048
    $region33: #{tpu_custom_call.1} parent=1 // pred_fallthru
      _
    %v62 = vld [vmem:[#allocation2] sm:$0xff]
    %v63 = vld [vmem:[#allocation2 + $0x8] sm:$0xff]
    %v64 = vld [vmem:[#allocation5] sm:$0xff]
    %v65 = vld [vmem:[#allocation5 + $0x8] sm:$0xff]
    %v66 = vld [vmem:[#allocation5 + $0x10] sm:$0xff]
    %v67 = vld [vmem:[#allocation5 + $0x18] sm:$0xff]
    %v68 = vld [vmem:[#allocation5 + $0x20] sm:$0xff]
    %v69 = vld [vmem:[#allocation5 + $0x28] sm:$0xff]
    %v70 = vld [vmem:[#allocation5 + $0x30] sm:$0xff]
    %v71 = vld [vmem:[#allocation5 + $0x38] sm:$0xff]
    %v72 = vld [vmem:[#allocation5 + $0x40] sm:$0xff]
    %v73 = vld [vmem:[#allocation5 + $0x48] sm:$0xff]
    %v74 = vld [vmem:[#allocation5 + $0x50] sm:$0xff]
    %v75 = vld [vmem:[#allocation5 + $0x58] sm:$0xff]
    %v76 = vld [vmem:[#allocation5 + $0x60] sm:$0xff]
    %v77 = vld [vmem:[#allocation5 + $0x68] sm:$0xff]
    %v78 = vld [vmem:[#allocation5 + $0x70] sm:$0xff]
    %v79 = vld [vmem:[#allocation5 + $0x78] sm:$0xff]
    %v80 = vld [vmem:[%s2] sm:$0x1]
    %v82 = vlaneseq
    %v83 = vshrl.u32 %v82, 7
    %v84 = vsub.s32 0, %v83
    %v85 = vrot.slane %v80, %v84
    %87 = vmatprep.subr.mxu0 0.0
    %88 = vmatpush1.msra.mxu0 %v64
    %89 = vmatprep.subr.mxu0 0.0
    %90 = vmatpush1.msra.mxu0 %v65
    %91 = vmatprep.subr.mxu0 0.0
    %92 = vmatpush1.msra.mxu0 %v66
    %93 = vmatprep.subr.mxu0 0.0
    %94 = vmatpush1.msra.mxu0 %v67
    %95 = vmatprep.subr.mxu0 0.0
    %96 = vmatpush1.msra.mxu0 %v68
    %97 = vmatprep.subr.mxu0 0.0
    %98 = vmatpush1.msra.mxu0 %v69
    %99 = vmatprep.subr.mxu0 0.0
    %100 = vmatpush1.msra.mxu0 %v70
    %101 = vmatprep.subr.mxu0 0.0
    %102 = vmatpush1.msra.mxu0 %v71
    %103 = vmatprep.subr.mxu0 0.0
    %104 = vmatpush1.msra.mxu0 %v72
    %105 = vmatprep.subr.mxu0 0.0
    %106 = vmatpush1.msra.mxu0 %v73
    %107 = vmatprep.subr.mxu0 0.0
    %108 = vmatpush1.msra.mxu0 %v74
    %109 = vmatprep.subr.mxu0 0.0
    %110 = vmatpush1.msra.mxu0 %v75
    %111 = vmatprep.subr.mxu0 0.0
    %112 = vmatpush1.msra.mxu0 %v76
    %113 = vmatprep.subr.mxu0 0.0
    %114 = vmatpush1.msra.mxu0 %v77
    %115 = vmatprep.subr.mxu0 0.0
    %116 = vmatpush1.msra.mxu0 %v78
    %117 = vmatprep.subr.mxu0 0.0
    %118 = vmatpush1.msra.mxu0 %v79
    %119 = vmatprep.subr.mxu0 0.0
    %120 = vmatpush1.msra.mxu0 0.0
    %121 = vmatprep.subr.mxu0 0.0
    %122 = vmatpush1.msra.mxu0 0.0
    %123 = vmatprep.subr.mxu0 0.0
    %124 = vmatpush1.msra.mxu0 0.0
    %125 = vmatprep.subr.mxu0 0.0
    %126 = vmatpush1.msra.mxu0 0.0
    %127 = vmatprep.subr.mxu0 0.0
    %128 = vmatpush1.msra.mxu0 0.0
    %129 = vmatprep.subr.mxu0 0.0
    %130 = vmatpush1.msra.mxu0 0.0
    %131 = vmatprep.subr.mxu0 0.0
    %132 = vmatpush1.msra.mxu0 0.0
    %133 = vmatprep.subr.mxu0 0.0
    %134 = vmatpush1.msra.mxu0 0.0
    %135 = vmatprep.subr.mxu0 0.0
    %136 = vmatpush1.msra.mxu0 0.0
    %137 = vmatprep.subr.mxu0 0.0
    %138 = vmatpush1.msra.mxu0 0.0
    %139 = vmatprep.subr.mxu0 0.0
    %140 = vmatpush1.msra.mxu0 0.0
    %141 = vmatprep.subr.mxu0 0.0
    %142 = vmatpush1.msra.mxu0 0.0
    %143 = vmatprep.subr.mxu0 0.0
    %144 = vmatpush1.msra.mxu0 0.0
    %145 = vmatprep.subr.mxu0 0.0
    %146 = vmatpush1.msra.mxu0 0.0
    %147 = vmatprep.subr.mxu0 0.0
    %148 = vmatpush1.msra.mxu0 0.0
    %149 = vmatprep.subr.mxu0 0.0
    %150 = vmatpush1.msra.mxu0 0.0
    %151 = vmatprep.mubr.f32.mxu0 0.0
    %152 = vmatmul.mubr.f32.gmra.mrb[0].mxu0 %v62
    %v153 = vpop.f32.mrb[0].mxu0
    %v154 = vadd.f32 %v85, %v153
    %v155 = vpop.f32.mrb[0].mxu0
    %156 = vmatprep.mubr.f32.mxu0 0.0
    %157 = vmatmul.mubr.f32.gmra.mrb[0].mxu0 %v63
    %v158 = vpop.f32.mrb[0].mxu0
    %v159 = vadd.f32 %v85, %v158
    %v160 = vpop.f32.mrb[0].mxu0
    %161 = vdwg.mxu0
    %v162 = vld [vmem:[#allocation7] sm:$0xff]
    %v163 = vld [vmem:[#allocation7 + $0x8] sm:$0xff]
    %v164 = vld [vmem:[#allocation7 + $0x10] sm:$0xff]
    %v165 = vld [vmem:[#allocation7 + $0x18] sm:$0xff]
    %v166 = vld [vmem:[#allocation7 + $0x20] sm:$0xff]
    %v167 = vld [vmem:[#allocation7 + $0x28] sm:$0xff]
    %v168 = vld [vmem:[#allocation7 + $0x30] sm:$0xff]
    %v169 = vld [vmem:[#allocation7 + $0x38] sm:$0xff]
    %v170 = vld [vmem:[#allocation7 + $0x40] sm:$0xff]
    %v171 = vld [vmem:[#allocation7 + $0x48] sm:$0xff]
    %v172 = vld [vmem:[#allocation7 + $0x50] sm:$0xff]
    %v173 = vld [vmem:[#allocation7 + $0x58] sm:$0xff]
    %v174 = vld [vmem:[#allocation7 + $0x60] sm:$0xff]
    %v175 = vld [vmem:[#allocation7 + $0x68] sm:$0xff]
    %v176 = vld [vmem:[#allocation7 + $0x70] sm:$0xff]
    %v177 = vld [vmem:[#allocation7 + $0x78] sm:$0xff]
    %v178 = vld [vmem:[%s4] sm:$0x1]
    %v180 = vlaneseq
    %v181 = vshrl.u32 %v180, 7
    %v182 = vsub.s32 0, %v181
    %v183 = vrot.slane %v178, %v182
    %185 = vmatprep.subr.mxu0 0.0
    %186 = vmatpush1.msra.mxu0 %v162
    %187 = vmatprep.subr.mxu0 0.0
    %188 = vmatpush1.msra.mxu0 %v163
    %189 = vmatprep.subr.mxu0 0.0
    %190 = vmatpush1.msra.mxu0 %v164
    %191 = vmatprep.subr.mxu0 0.0
    %192 = vmatpush1.msra.mxu0 %v165
    %193 = vmatprep.subr.mxu0 0.0
    %194 = vmatpush1.msra.mxu0 %v166
    %195 = vmatprep.subr.mxu0 0.0
    %196 = vmatpush1.msra.mxu0 %v167
    %197 = vmatprep.subr.mxu0 0.0
    %198 = vmatpush1.msra.mxu0 %v168
    %199 = vmatprep.subr.mxu0 0.0
    %200 = vmatpush1.msra.mxu0 %v169
    %201 = vmatprep.subr.mxu0 0.0
    %202 = vmatpush1.msra.mxu0 %v170
    %203 = vmatprep.subr.mxu0 0.0
    %204 = vmatpush1.msra.mxu0 %v171
    %205 = vmatprep.subr.mxu0 0.0
    %206 = vmatpush1.msra.mxu0 %v172
    %207 = vmatprep.subr.mxu0 0.0
    %208 = vmatpush1.msra.mxu0 %v173
    %209 = vmatprep.subr.mxu0 0.0
    %210 = vmatpush1.msra.mxu0 %v174
    %211 = vmatprep.subr.mxu0 0.0
    %212 = vmatpush1.msra.mxu0 %v175
    %213 = vmatprep.subr.mxu0 0.0
    %214 = vmatpush1.msra.mxu0 %v176
    %215 = vmatprep.subr.mxu0 0.0
    %216 = vmatpush1.msra.mxu0 %v177
    %217 = vmatprep.subr.mxu0 0.0
    %218 = vmatpush1.msra.mxu0 0.0
    %219 = vmatprep.subr.mxu0 0.0
    %220 = vmatpush1.msra.mxu0 0.0
    %221 = vmatprep.subr.mxu0 0.0
    %222 = vmatpush1.msra.mxu0 0.0
    %223 = vmatprep.subr.mxu0 0.0
    %224 = vmatpush1.msra.mxu0 0.0
    %225 = vmatprep.subr.mxu0 0.0
    %226 = vmatpush1.msra.mxu0 0.0
    %227 = vmatprep.subr.mxu0 0.0
    %228 = vmatpush1.msra.mxu0 0.0
    %229 = vmatprep.subr.mxu0 0.0
    %230 = vmatpush1.msra.mxu0 0.0
    %231 = vmatprep.subr.mxu0 0.0
    %232 = vmatpush1.msra.mxu0 0.0
    %233 = vmatprep.subr.mxu0 0.0
    %234 = vmatpush1.msra.mxu0 0.0
    %235 = vmatprep.subr.mxu0 0.0
    %236 = vmatpush1.msra.mxu0 0.0
    %237 = vmatprep.subr.mxu0 0.0
    %238 = vmatpush1.msra.mxu0 0.0
    %239 = vmatprep.subr.mxu0 0.0
    %240 = vmatpush1.msra.mxu0 0.0
    %241 = vmatprep.subr.mxu0 0.0
    %242 = vmatpush1.msra.mxu0 0.0
    %243 = vmatprep.subr.mxu0 0.0
    %244 = vmatpush1.msra.mxu0 0.0
    %245 = vmatprep.subr.mxu0 0.0
    %246 = vmatpush1.msra.mxu0 0.0
    %247 = vmatprep.subr.mxu0 0.0
    %248 = vmatpush1.msra.mxu0 0.0
    %249 = vmatprep.mubr.f32.mxu0 0.0
    %250 = vmatmul.mubr.f32.gmra.mrb[0].mxu0 %v154
    %v251 = vpop.f32.mrb[0].mxu0
    %v252 = vadd.f32 %v183, %v251
    %v253 = vpop.f32.mrb[0].mxu0
    %254 = vmatprep.mubr.f32.mxu0 0.0
    %255 = vmatmul.mubr.f32.gmra.mrb[0].mxu0 %v159
    %v256 = vpop.f32.mrb[0].mxu0
    %v257 = vadd.f32 %v183, %v256
    %v258 = vpop.f32.mrb[0].mxu0
    %259 = vdwg.mxu0
    %260 = vst [vmem:[#allocation8] sm:$0xff] %v252
    %261 = vst [vmem:[#allocation8 + $0x8] sm:$0xff] %v257
    // Predicated region
    $region34: #{tpu_custom_call.1} parent=1 // pred_check
      _
    $region35: #{tpu_custom_call.1} parent=1 // pred_check_branch
      %263 = sbr.rel (0) target = $region37
    $region36: #{tpu_custom_call.1} parent=1 // pred_region
      %s265 = ssub.s32 256, 256
      %266 = vsyncadd [#allocation4], %s265
      %s267 = sshll.u32 [#allocation8], 4
      %s268 = int_to_ptr.vmem [resolvable:$true] %s267
      %273 = dma.vmem_to_hbm [thread:$0]  %s268, 256, %s5, [#allocation4], 128, 128, 8
    $region37: #{tpu_custom_call.1} parent=1 // pred_fallthru
      _
    // Predicated region
    $region38: #{tpu_custom_call.1} parent=1 // pred_check
      _
    $region39: #{tpu_custom_call.1} parent=1 // pred_check_branch
      %275 = sbr.rel (0) target = $region41
    $region40: #{tpu_custom_call.1} parent=1 // pred_region
      %276 = dma.done [#allocation4], 256
    $region41: #{tpu_custom_call.1} parent=1 // pred_fallthru
      _
    %277 = vsyncpa [#allocation3], 1
    %278 = vsyncpa [#allocation6], 1
    %279 = vsyncpa [#allocation4], 1

</llo_original>
